<compile_context>
chip_gen: v7x
topology: tpu7x:2x2x1
jax: 0.10.0
libtpu: 0.0.40
codegen_flags: <defaults>
</compile_context>

<pallas_src>
import jax
import jax.numpy as jnp
from jax.experimental import pallas as pl
from jax.experimental.pallas import tpu as pltpu

IN_FEATURES = 495   # fixed by the module: nn.Linear(495, embedding_size)
K_PAD = 512         # zero-padded contraction dim (4 full vregs per row)


def _round_up(x, m):
    return ((x + m - 1) // m) * m


def _mirna_embedding_kernel(x_ref, w_ref, b_ref, o_ref):
    # x_ref: (TM, 512) bf16   w_ref: (512, TN) bf16
    # b_ref: (1, TN)  f32     o_ref: (TM, TN)  f32
    acc = jnp.dot(x_ref[...], w_ref[...], preferred_element_type=jnp.float32)
    o_ref[...] = (acc + b_ref[...]).astype(o_ref.dtype)
    # TODO(synk): Dropout is identity in eval / no_grad inference; training-mode
    # dropout (pltpu.prng_random_bits mask) is intentionally not applied.


def mirna_embedding(x, w, b, *, tm=512, tn=512, compute_dtype=jnp.bfloat16):
    """MirnaEmbedding forward:  y = x @ W^T + b.

    x: [N, 495] f32 (ndata['m_features'])
    w: [E, 495] f32 (PyTorch nn.Linear weight layout)
    b: [E]      f32
    returns [N, E] f32
    """
    n, k = x.shape
    assert k == IN_FEATURES
    e, k2 = w.shape
    assert k2 == IN_FEATURES
    assert b.shape == (e,)
    out_dtype = x.dtype

    # --- Row (batch) tiling: MXU-friendly 256/512-row tiles, pad N up. ---
    tm_eff = _round_up(n, 8) if n < tm else tm
    n_pad = _round_up(n, tm_eff)

    # --- Output (E) tiling: lane-dense multiple of 128; tile when E is big. ---
    e_pad = _round_up(e, 128)
    if e_pad <= tn:
        tn_eff = e_pad
    else:
        tn_eff = tn
        e_pad = _round_up(e_pad, tn_eff)

    # --- Host-side prep: pad K to 512, pad N/E, cast streams to bf16. ---
    x_p = jnp.zeros((n_pad, K_PAD), compute_dtype).at[:n, :k].set(
        x.astype(compute_dtype))
    w_t = jnp.zeros((K_PAD, e_pad), compute_dtype).at[:k, :e].set(
        w.T.astype(compute_dtype))
    b_p = jnp.zeros((1, e_pad), jnp.float32).at[0, :e].set(
        b.astype(jnp.float32))

    grid = (n_pad // tm_eff, e_pad // tn_eff)

    # Explicit VMEM budget (double-buffered tiles + headroom), safe on v7x's
    # smaller 64 MiB VMEM as well as v5e/v6e.
    itemsize = jnp.dtype(compute_dtype).itemsize
    tile_bytes = 2 * (tm_eff * K_PAD * itemsize      # x tile (double-buffered)
                      + K_PAD * tn_eff * itemsize    # weight tile
                      + tn_eff * 4                   # bias tile
                      + tm_eff * tn_eff * 4)         # output tile
    vmem_limit = int(min(max(2 * tile_bytes, 16 * 1024 * 1024),
                         48 * 1024 * 1024))

    cost = pl.CostEstimate(
        flops=2 * n_pad * K_PAD * e_pad,
        transcendentals=0,
        bytes_accessed=(x_p.size * itemsize + w_t.size * itemsize
                        + b_p.size * 4 + n_pad * e_pad * 4),
    )

    out = pl.pallas_call(
        _mirna_embedding_kernel,
        out_shape=jax.ShapeDtypeStruct((n_pad, e_pad), out_dtype),
        grid_spec=pltpu.PrefetchScalarGridSpec(
            num_scalar_prefetch=0,
            grid=grid,
            in_specs=[
                # streaming row tile of features, K kept whole (512)
                pl.BlockSpec((tm_eff, K_PAD), lambda i, j: (i, 0)),
                # weight column tile, resident across the row axis
                pl.BlockSpec((K_PAD, tn_eff), lambda i, j: (0, j)),
                # bias column tile
                pl.BlockSpec((1, tn_eff), lambda i, j: (0, j)),
            ],
            out_specs=pl.BlockSpec((tm_eff, tn_eff), lambda i, j: (i, j)),
        ),
        compiler_params=pltpu.CompilerParams(
            dimension_semantics=("parallel", "parallel"),
            vmem_limit_bytes=vmem_limit,
        ),
        cost_estimate=cost,
    )(x_p, w_t, b_p)

    return out[:n, :e]


def init_params(key, embedding_size):
    """Mirror nn.Linear default init: U(-1/sqrt(fan_in), 1/sqrt(fan_in))."""
    kw, kb = jax.random.split(key)
    bound = 1.0 / jnp.sqrt(jnp.float32(IN_FEATURES))
    w = jax.random.uniform(
        kw, (embedding_size, IN_FEATURES), jnp.float32, minval=-bound, maxval=bound)
    b = jax.random.uniform(
        kb, (embedding_size,), jnp.float32, minval=-bound, maxval=bound)
    return w, b


if __name__ == "__main__":
    key = jax.random.PRNGKey(0)
    k_in, k_params = jax.random.split(key)

    batch = 10            # miRNA node count (deliberately not a multiple of 8)
    embedding_size = 200  # deliberately not a multiple of 128 -> exercises padding

    # ndata['m_features']: [batch, 495]
    x = jax.random.normal(k_in, (batch, IN_FEATURES), jnp.float32)
    w, b = init_params(k_params, embedding_size)

    out = mirna_embedding(x, w, b)
    out = jax.block_until_ready(out)
    assert out.shape == (batch, embedding_size)

    # Reference with identical input precision (bf16 inputs, f32 accumulation).
    x_bf = x.astype(jnp.bfloat16).astype(jnp.float32)
    w_bf = w.astype(jnp.bfloat16).astype(jnp.float32)
    ref_bf16 = x_bf @ w_bf.T + b
    assert jnp.allclose(out, ref_bf16, atol=1e-2, rtol=1e-2), \
        "mismatch vs bf16-precision reference"

    # Sanity check against the full-f32 PyTorch-equivalent reference.
    ref_f32 = x @ w.T + b
    assert jnp.allclose(out, ref_f32, atol=5e-2, rtol=5e-2), \
        "mismatch vs f32 reference"

    print("KERNEL_OK")
</pallas_src>

<mosaic_0001>
module attributes {stable_mosaic.version = 11 : i64} {
  func.func @_mirna_embedding_kernel(%arg0: i32, %arg1: i32, %arg2: memref<16x512xbf16, #tpu.memory_space<vmem>>, %arg3: memref<512x256xbf16, #tpu.memory_space<vmem>>, %arg4: memref<1x256xf32, #tpu.memory_space<vmem>>, %arg5: memref<16x256xf32, #tpu.memory_space<vmem>>) attributes {dimension_semantics = [#tpu.dimension_semantics<parallel>, #tpu.dimension_semantics<parallel>], iteration_bounds = array<i64: 1, 1>, scalar_prefetch = 0 : i64, scratch_operands = 0 : i64, tpu.core_type = #tpu.core_type<tc>, window_params = [{transform_indices = @transform_0, window_bounds = array<i64: 16, 512>}, {transform_indices = @transform_1, window_bounds = array<i64: 512, 256>}, {transform_indices = @transform_2, window_bounds = array<i64: 1, 256>}, {transform_indices = @transform_3, window_bounds = array<i64: 16, 256>}]} {
    %c0 = arith.constant 0 : index
    %c0_0 = arith.constant 0 : index
    %0 = vector.load %arg2[%c0, %c0_0] : memref<16x512xbf16, #tpu.memory_space<vmem>>, vector<16x512xbf16>
    %c0_1 = arith.constant 0 : index
    %c0_2 = arith.constant 0 : index
    %1 = vector.load %arg3[%c0_1, %c0_2] : memref<512x256xbf16, #tpu.memory_space<vmem>>, vector<512x256xbf16>
    %cst = arith.constant dense<0.000000e+00> : vector<16x256xf32>
    %2 = tpu.matmul %0, %1, %cst {dimension_numbers = #tpu.dot_dimension_numbers<[1], [0], [0], [1], [0, 0, 1, 1], [], []>} : vector<16x512xbf16>, vector<512x256xbf16>, vector<16x256xf32> -> vector<16x256xf32>
    %c0_3 = arith.constant 0 : index
    %c0_4 = arith.constant 0 : index
    %3 = vector.load %arg4[%c0_3, %c0_4] : memref<1x256xf32, #tpu.memory_space<vmem>>, vector<1x256xf32>
    %4 = vector.broadcast %3 : vector<1x256xf32> to vector<16x256xf32>
    %5 = arith.addf %2, %4 : vector<16x256xf32>
    %c0_5 = arith.constant 0 : index
    %c0_6 = arith.constant 0 : index
    %6 = vector.load %arg5[%c0_5, %c0_6] : memref<16x256xf32, #tpu.memory_space<vmem>>, vector<16x256xf32>
    tpu.vector_store %arg5[%c0_5, %c0_6], %5 {strides = array<i32>} : memref<16x256xf32, #tpu.memory_space<vmem>>, vector<16x256xf32>,
    return
  }
  func.func @transform_0(%arg0: i32, %arg1: i32) -> (i32, i32) {
    %c0_i32 = arith.constant 0 : i32
    %c0_i32_0 = arith.constant 0 : i32
    return %arg0, %c0_i32 : i32, i32
  }
  func.func @transform_1(%arg0: i32, %arg1: i32) -> (i32, i32) {
    %c0_i32 = arith.constant 0 : i32
    %c0_i32_0 = arith.constant 0 : i32
    return %c0_i32, %arg1 : i32, i32
  }
  func.func @transform_2(%arg0: i32, %arg1: i32) -> (i32, i32) {
    %c0_i32 = arith.constant 0 : i32
    %c0_i32_0 = arith.constant 0 : i32
    return %c0_i32, %arg1 : i32, i32
  }
  func.func @transform_3(%arg0: i32, %arg1: i32) -> (i32, i32) {
    %c0_i32 = arith.constant 0 : i32
    return %arg0, %arg1 : i32, i32
  }
}

</mosaic_0001>

<llo_original>
// kernel: tpu_custom_call.1
$region0: #{tpu_custom_call.1}
  #allocation0 [shape = 'u32[]', space=smem, size = 0x4, offset = 0x4, fixed_abs, tag = 'smem constant byte address 0x4 - core index']
  #allocation1 [shape = 'u32[144,128]{1,0:T(1,128)}', space=vmem, size = 0x12000, scoped, tag = 'internal scratch']
  %s0 = inlined_call_operand.hbm [shape: bf16[16,512], index: 0, kind: input, shape index: {}]
  %s1 = inlined_call_operand.hbm [shape: bf16[512,256], index: 1, kind: input, shape index: {}]
  %s2 = inlined_call_operand.vmem [shape: f32[1,256], index: 2, kind: input, shape index: {}]
  %s3 = inlined_call_operand.hbm [shape: f32[16,256], index: 3, kind: output, shape index: {}]
  %s4 = sld [smem:[#allocation0]]
  $region30: #{tpu_custom_call.1} parent=0
    _
  %s6 = ssub.s32 1, %s4
  %s7 = scalar_select 0, %s6, %s4
  $region1: #{tpu_custom_call.1} parent=0
    #allocation2 [shape = 'u8[16384]{0}', space=vmem, size = 0x4000, scoped, tag = 'input window, operand 0, single buffered']
    #allocation3 [shape = 's32[1]{0}', space=sflag, size = 0x4, scoped, tag = 'scoped memory for tpu_custom_call.1']
    #allocation4 [shape = 's32[1]{0}', space=sflag, size = 0x4, scoped, tag = 'scoped memory for tpu_custom_call.1']
    #allocation5 [shape = 'u8[262144]{0}', space=vmem, size = 0x40000, scoped, tag = 'input window, operand 1, single buffered']
    #allocation6 [shape = 's32[1]{0}', space=sflag, size = 0x4, scoped, tag = 'scoped memory for tpu_custom_call.1']
    #allocation7 [shape = 'u8[16384]{0}', space=vmem, size = 0x4000, scoped, tag = 'output window, operand 0, single buffered']
    %8 = vsyncpa [#allocation3], 0
    %9 = vsyncpa [#allocation6], 0
    %10 = vsyncpa [#allocation4], 0
    // Predicated region
    $region2: #{tpu_custom_call.1} parent=1 // pred_check
      _
    $region3: #{tpu_custom_call.1} parent=1 // pred_check_branch
      %12 = sbr.rel (0) target = $region5
    $region4: #{tpu_custom_call.1} parent=1 // pred_region
      %s14 = ssub.s32 512, 512
      %15 = vsyncadd [#allocation3], %s14
      %s16 = sshll.u32 [#allocation2], 4
      %s17 = int_to_ptr.vmem [resolvable:$true] %s16
      %22 = dma.hbm_to_vmem [thread:$0]  %s0, 512, %s17, [#allocation3], 256, 256, 16
    $region5: #{tpu_custom_call.1} parent=1 // pred_fallthru
      _
    // Predicated region
    $region6: #{tpu_custom_call.1} parent=1 // pred_check
      _
    $region7: #{tpu_custom_call.1} parent=1 // pred_check_branch
      %24 = sbr.rel (0) target = $region9
    $region8: #{tpu_custom_call.1} parent=1 // pred_region
      %s26 = ssub.s32 8192, 8192
      %27 = vsyncadd [#allocation6], %s26
      %s28 = sshll.u32 [#allocation5], 4
      %s29 = int_to_ptr.vmem [resolvable:$true] %s28
      %34 = dma.hbm_to_vmem [thread:$0]  %s1, 8192, %s29, [#allocation6], 128, 128, 8
    $region9: #{tpu_custom_call.1} parent=1 // pred_fallthru
      _
    // Predicated region
    $region10: #{tpu_custom_call.1} parent=1 // pred_check
      _
    $region11: #{tpu_custom_call.1} parent=1 // pred_check_branch
      %36 = sbr.rel (0) target = $region13
    $region12: #{tpu_custom_call.1} parent=1 // pred_region
      _
    $region13: #{tpu_custom_call.1} parent=1 // pred_fallthru
      _
    // Predicated region
    $region14: #{tpu_custom_call.1} parent=1 // pred_check
      _
    $region15: #{tpu_custom_call.1} parent=1 // pred_check_branch
      %38 = sbr.rel (0) target = $region17
    $region16: #{tpu_custom_call.1} parent=1 // pred_region
      %39 = dma.done [#allocation3], 512
    $region17: #{tpu_custom_call.1} parent=1 // pred_fallthru
      _
    // Predicated region
    $region18: #{tpu_custom_call.1} parent=1 // pred_check
      _
    $region19: #{tpu_custom_call.1} parent=1 // pred_check_branch
      %41 = sbr.rel (0) target = $region21
    $region20: #{tpu_custom_call.1} parent=1 // pred_region
      %42 = dma.done [#allocation6], 8192
    $region21: #{tpu_custom_call.1} parent=1 // pred_fallthru
      _
    %v43 = vld [vmem:[#allocation2] sm:$0xff]
    %v44 = vld [vmem:[#allocation2 + $0x8] sm:$0xff]
    %v45 = vld [vmem:[#allocation2 + $0x10] sm:$0xff]
    %v46 = vld [vmem:[#allocation2 + $0x18] sm:$0xff]
    %v47 = vld [vmem:[#allocation5] sm:$0xff]
    %v48 = vld [vmem:[#allocation5 + $0x8] sm:$0xff]
    %v49 = vld [vmem:[#allocation5 + $0x10] sm:$0xff]
    %v50 = vld [vmem:[#allocation5 + $0x18] sm:$0xff]
    %v51 = vld [vmem:[#allocation5 + $0x20] sm:$0xff]
    %v52 = vld [vmem:[#allocation5 + $0x28] sm:$0xff]
    %v53 = vld [vmem:[#allocation5 + $0x30] sm:$0xff]
    %v54 = vld [vmem:[#allocation5 + $0x38] sm:$0xff]
    %v55 = vld [vmem:[#allocation5 + $0x40] sm:$0xff]
    %v56 = vld [vmem:[#allocation5 + $0x48] sm:$0xff]
    %v57 = vld [vmem:[#allocation5 + $0x50] sm:$0xff]
    %v58 = vld [vmem:[#allocation5 + $0x58] sm:$0xff]
    %v59 = vld [vmem:[#allocation5 + $0x60] sm:$0xff]
    %v60 = vld [vmem:[#allocation5 + $0x68] sm:$0xff]
    %v61 = vld [vmem:[#allocation5 + $0x70] sm:$0xff]
    %v62 = vld [vmem:[#allocation5 + $0x78] sm:$0xff]
    %v63 = vld [vmem:[#allocation5 + $0x80] sm:$0xff]
    %v64 = vld [vmem:[#allocation5 + $0x88] sm:$0xff]
    %v65 = vld [vmem:[#allocation5 + $0x90] sm:$0xff]
    %v66 = vld [vmem:[#allocation5 + $0x98] sm:$0xff]
    %v67 = vld [vmem:[#allocation5 + $0xa0] sm:$0xff]
    %v68 = vld [vmem:[#allocation5 + $0xa8] sm:$0xff]
    %v69 = vld [vmem:[#allocation5 + $0xb0] sm:$0xff]
    %v70 = vld [vmem:[#allocation5 + $0xb8] sm:$0xff]
    %v71 = vld [vmem:[#allocation5 + $0xc0] sm:$0xff]
    %v72 = vld [vmem:[#allocation5 + $0xc8] sm:$0xff]
    %v73 = vld [vmem:[#allocation5 + $0xd0] sm:$0xff]
    %v74 = vld [vmem:[#allocation5 + $0xd8] sm:$0xff]
    %v75 = vld [vmem:[#allocation5 + $0xe0] sm:$0xff]
    %v76 = vld [vmem:[#allocation5 + $0xe8] sm:$0xff]
    %v77 = vld [vmem:[#allocation5 + $0xf0] sm:$0xff]
    %v78 = vld [vmem:[#allocation5 + $0xf8] sm:$0xff]
    %v79 = vld [vmem:[#allocation5 + $0x100] sm:$0xff]
    %v80 = vld [vmem:[#allocation5 + $0x108] sm:$0xff]
    %v81 = vld [vmem:[#allocation5 + $0x110] sm:$0xff]
    %v82 = vld [vmem:[#allocation5 + $0x118] sm:$0xff]
    %v83 = vld [vmem:[#allocation5 + $0x120] sm:$0xff]
    %v84 = vld [vmem:[#allocation5 + $0x128] sm:$0xff]
    %v85 = vld [vmem:[#allocation5 + $0x130] sm:$0xff]
    %v86 = vld [vmem:[#allocation5 + $0x138] sm:$0xff]
    %v87 = vld [vmem:[#allocation5 + $0x140] sm:$0xff]
    %v88 = vld [vmem:[#allocation5 + $0x148] sm:$0xff]
    %v89 = vld [vmem:[#allocation5 + $0x150] sm:$0xff]
    %v90 = vld [vmem:[#allocation5 + $0x158] sm:$0xff]
    %v91 = vld [vmem:[#allocation5 + $0x160] sm:$0xff]
    %v92 = vld [vmem:[#allocation5 + $0x168] sm:$0xff]
    %v93 = vld [vmem:[#allocation5 + $0x170] sm:$0xff]
    %v94 = vld [vmem:[#allocation5 + $0x178] sm:$0xff]
    %v95 = vld [vmem:[#allocation5 + $0x180] sm:$0xff]
    %v96 = vld [vmem:[#allocation5 + $0x188] sm:$0xff]
    %v97 = vld [vmem:[#allocation5 + $0x190] sm:$0xff]
    %v98 = vld [vmem:[#allocation5 + $0x198] sm:$0xff]
    %v99 = vld [vmem:[#allocation5 + $0x1a0] sm:$0xff]
    %v100 = vld [vmem:[#allocation5 + $0x1a8] sm:$0xff]
    %v101 = vld [vmem:[#allocation5 + $0x1b0] sm:$0xff]
    %v102 = vld [vmem:[#allocation5 + $0x1b8] sm:$0xff]
    %v103 = vld [vmem:[#allocation5 + $0x1c0] sm:$0xff]
    %v104 = vld [vmem:[#allocation5 + $0x1c8] sm:$0xff]
    %v105 = vld [vmem:[#allocation5 + $0x1d0] sm:$0xff]
    %v106 = vld [vmem:[#allocation5 + $0x1d8] sm:$0xff]
    %v107 = vld [vmem:[#allocation5 + $0x1e0] sm:$0xff]
    %v108 = vld [vmem:[#allocation5 + $0x1e8] sm:$0xff]
    %v109 = vld [vmem:[#allocation5 + $0x1f0] sm:$0xff]
    %v110 = vld [vmem:[#allocation5 + $0x1f8] sm:$0xff]
    %v111 = vld [vmem:[%s2] sm:$0x3]
    %v113 = vlaneseq
    %v114 = vshrl.u32 %v113, 7
    %v115 = vsub.s32 0, %v114
    %v116 = vrot.slane %v111, %v115
    %v117 = vlaneseq
    %v118 = vshrl.u32 %v117, 7
    %v119 = vsub.s32 1, %v118
    %v120 = vrot.slane %v111, %v119
    %v127 = vunpack.c.l.b16 %v43
    %v128 = vunpack.c.h.b16 %v43
    %v129 = vunpack.c.l.b16 %v44
    %v130 = vunpack.c.h.b16 %v44
    %v131 = vunpack.c.l.b16 %v45
    %v132 = vunpack.c.h.b16 %v45
    %v133 = vunpack.c.l.b16 %v46
    %v134 = vunpack.c.h.b16 %v46
    %v135 = vpack.c.b16 %v131, %v127
    %v136 = vpack.c.b16 %v132, %v128
    %v137 = vpack.c.b16 %v133, %v129
    %v138 = vpack.c.b16 %v134, %v130
    %v207 = vunpack.c.l.b16 %v47
    %v208 = vunpack.c.h.b16 %v47
    %v209 = vunpack.c.l.b16 %v48
    %v210 = vunpack.c.h.b16 %v48
    %v211 = vunpack.c.l.b16 %v49
    %v212 = vunpack.c.h.b16 %v49
    %v213 = vunpack.c.l.b16 %v50
    %v214 = vunpack.c.h.b16 %v50
    %v215 = vunpack.c.l.b16 %v51
    %v216 = vunpack.c.h.b16 %v51
    %v217 = vunpack.c.l.b16 %v52
    %v218 = vunpack.c.h.b16 %v52
    %v219 = vunpack.c.l.b16 %v53
    %v220 = vunpack.c.h.b16 %v53
    %v221 = vunpack.c.l.b16 %v54
    %v222 = vunpack.c.h.b16 %v54
    %v223 = vunpack.c.l.b16 %v55
    %v224 = vunpack.c.h.b16 %v55
    %v225 = vunpack.c.l.b16 %v56
    %v226 = vunpack.c.h.b16 %v56
    %v227 = vunpack.c.l.b16 %v57
    %v228 = vunpack.c.h.b16 %v57
    %v229 = vunpack.c.l.b16 %v58
    %v230 = vunpack.c.h.b16 %v58
    %v231 = vunpack.c.l.b16 %v59
    %v232 = vunpack.c.h.b16 %v59
    %v233 = vunpack.c.l.b16 %v60
    %v234 = vunpack.c.h.b16 %v60
    %v235 = vunpack.c.l.b16 %v61
    %v236 = vunpack.c.h.b16 %v61
    %v237 = vunpack.c.l.b16 %v62
    %v238 = vunpack.c.h.b16 %v62
    %v239 = vunpack.c.l.b16 %v63
    %v240 = vunpack.c.h.b16 %v63
    %v241 = vunpack.c.l.b16 %v64
    %v242 = vunpack.c.h.b16 %v64
    %v243 = vunpack.c.l.b16 %v65
    %v244 = vunpack.c.h.b16 %v65
    %v245 = vunpack.c.l.b16 %v66
    %v246 = vunpack.c.h.b16 %v66
    %v247 = vunpack.c.l.b16 %v67
    %v248 = vunpack.c.h.b16 %v67
    %v249 = vunpack.c.l.b16 %v68
    %v250 = vunpack.c.h.b16 %v68
    %v251 = vunpack.c.l.b16 %v69
    %v252 = vunpack.c.h.b16 %v69
    %v253 = vunpack.c.l.b16 %v70
    %v254 = vunpack.c.h.b16 %v70
    %v255 = vunpack.c.l.b16 %v71
    %v256 = vunpack.c.h.b16 %v71
    %v257 = vunpack.c.l.b16 %v72
    %v258 = vunpack.c.h.b16 %v72
    %v259 = vunpack.c.l.b16 %v73
    %v260 = vunpack.c.h.b16 %v73
    %v261 = vunpack.c.l.b16 %v74
    %v262 = vunpack.c.h.b16 %v74
    %v263 = vunpack.c.l.b16 %v75
    %v264 = vunpack.c.h.b16 %v75
    %v265 = vunpack.c.l.b16 %v76
    %v266 = vunpack.c.h.b16 %v76
    %v267 = vunpack.c.l.b16 %v77
    %v268 = vunpack.c.h.b16 %v77
    %v269 = vunpack.c.l.b16 %v78
    %v270 = vunpack.c.h.b16 %v78
    %v271 = vunpack.c.l.b16 %v79
    %v272 = vunpack.c.h.b16 %v79
    %v273 = vunpack.c.l.b16 %v80
    %v274 = vunpack.c.h.b16 %v80
    %v275 = vunpack.c.l.b16 %v81
    %v276 = vunpack.c.h.b16 %v81
    %v277 = vunpack.c.l.b16 %v82
    %v278 = vunpack.c.h.b16 %v82
    %v279 = vunpack.c.l.b16 %v83
    %v280 = vunpack.c.h.b16 %v83
    %v281 = vunpack.c.l.b16 %v84
    %v282 = vunpack.c.h.b16 %v84
    %v283 = vunpack.c.l.b16 %v85
    %v284 = vunpack.c.h.b16 %v85
    %v285 = vunpack.c.l.b16 %v86
    %v286 = vunpack.c.h.b16 %v86
    %v287 = vunpack.c.l.b16 %v87
    %v288 = vunpack.c.h.b16 %v87
    %v289 = vunpack.c.l.b16 %v88
    %v290 = vunpack.c.h.b16 %v88
    %v291 = vunpack.c.l.b16 %v89
    %v292 = vunpack.c.h.b16 %v89
    %v293 = vunpack.c.l.b16 %v90
    %v294 = vunpack.c.h.b16 %v90
    %v295 = vunpack.c.l.b16 %v91
    %v296 = vunpack.c.h.b16 %v91
    %v297 = vunpack.c.l.b16 %v92
    %v298 = vunpack.c.h.b16 %v92
    %v299 = vunpack.c.l.b16 %v93
    %v300 = vunpack.c.h.b16 %v93
    %v301 = vunpack.c.l.b16 %v94
    %v302 = vunpack.c.h.b16 %v94
    %v303 = vunpack.c.l.b16 %v95
    %v304 = vunpack.c.h.b16 %v95
    %v305 = vunpack.c.l.b16 %v96
    %v306 = vunpack.c.h.b16 %v96
    %v307 = vunpack.c.l.b16 %v97
    %v308 = vunpack.c.h.b16 %v97
    %v309 = vunpack.c.l.b16 %v98
    %v310 = vunpack.c.h.b16 %v98
    %v311 = vunpack.c.l.b16 %v99
    %v312 = vunpack.c.h.b16 %v99
    %v313 = vunpack.c.l.b16 %v100
    %v314 = vunpack.c.h.b16 %v100
    %v315 = vunpack.c.l.b16 %v101
    %v316 = vunpack.c.h.b16 %v101
    %v317 = vunpack.c.l.b16 %v102
    %v318 = vunpack.c.h.b16 %v102
    %v319 = vunpack.c.l.b16 %v103
    %v320 = vunpack.c.h.b16 %v103
    %v321 = vunpack.c.l.b16 %v104
    %v322 = vunpack.c.h.b16 %v104
    %v323 = vunpack.c.l.b16 %v105
    %v324 = vunpack.c.h.b16 %v105
    %v325 = vunpack.c.l.b16 %v106
    %v326 = vunpack.c.h.b16 %v106
    %v327 = vunpack.c.l.b16 %v107
    %v328 = vunpack.c.h.b16 %v107
    %v329 = vunpack.c.l.b16 %v108
    %v330 = vunpack.c.h.b16 %v108
    %v331 = vunpack.c.l.b16 %v109
    %v332 = vunpack.c.h.b16 %v109
    %v333 = vunpack.c.l.b16 %v110
    %v334 = vunpack.c.h.b16 %v110
    %v335 = vpack.c.b16 %v209, %v207
    %v336 = vpack.c.b16 %v210, %v208
    %v337 = vpack.c.b16 %v213, %v211
    %v338 = vpack.c.b16 %v214, %v212
    %v339 = vpack.c.b16 %v217, %v215
    %v340 = vpack.c.b16 %v218, %v216
    %v341 = vpack.c.b16 %v221, %v219
    %v342 = vpack.c.b16 %v222, %v220
    %v343 = vpack.c.b16 %v225, %v223
    %v344 = vpack.c.b16 %v226, %v224
    %v345 = vpack.c.b16 %v229, %v227
    %v346 = vpack.c.b16 %v230, %v228
    %v347 = vpack.c.b16 %v233, %v231
    %v348 = vpack.c.b16 %v234, %v232
    %v349 = vpack.c.b16 %v237, %v235
    %v350 = vpack.c.b16 %v238, %v236
    %v351 = vpack.c.b16 %v241, %v239
    %v352 = vpack.c.b16 %v242, %v240
    %v353 = vpack.c.b16 %v245, %v243
    %v354 = vpack.c.b16 %v246, %v244
    %v355 = vpack.c.b16 %v249, %v247
    %v356 = vpack.c.b16 %v250, %v248
    %v357 = vpack.c.b16 %v253, %v251
    %v358 = vpack.c.b16 %v254, %v252
    %v359 = vpack.c.b16 %v257, %v255
    %v360 = vpack.c.b16 %v258, %v256
    %v361 = vpack.c.b16 %v261, %v259
    %v362 = vpack.c.b16 %v262, %v260
    %v363 = vpack.c.b16 %v265, %v263
    %v364 = vpack.c.b16 %v266, %v264
    %v365 = vpack.c.b16 %v269, %v267
    %v366 = vpack.c.b16 %v270, %v268
    %v367 = vpack.c.b16 %v273, %v271
    %v368 = vpack.c.b16 %v274, %v272
    %v369 = vpack.c.b16 %v277, %v275
    %v370 = vpack.c.b16 %v278, %v276
    %v371 = vpack.c.b16 %v281, %v279
    %v372 = vpack.c.b16 %v282, %v280
    %v373 = vpack.c.b16 %v285, %v283
    %v374 = vpack.c.b16 %v286, %v284
    %v375 = vpack.c.b16 %v289, %v287
    %v376 = vpack.c.b16 %v290, %v288
    %v377 = vpack.c.b16 %v293, %v291
    %v378 = vpack.c.b16 %v294, %v292
    %v379 = vpack.c.b16 %v297, %v295
    %v380 = vpack.c.b16 %v298, %v296
    %v381 = vpack.c.b16 %v301, %v299
    %v382 = vpack.c.b16 %v302, %v300
    %v383 = vpack.c.b16 %v305, %v303
    %v384 = vpack.c.b16 %v306, %v304
    %v385 = vpack.c.b16 %v309, %v307
    %v386 = vpack.c.b16 %v310, %v308
    %v387 = vpack.c.b16 %v313, %v311
    %v388 = vpack.c.b16 %v314, %v312
    %v389 = vpack.c.b16 %v317, %v315
    %v390 = vpack.c.b16 %v318, %v316
    %v391 = vpack.c.b16 %v321, %v319
    %v392 = vpack.c.b16 %v322, %v320
    %v393 = vpack.c.b16 %v325, %v323
    %v394 = vpack.c.b16 %v326, %v324
    %v395 = vpack.c.b16 %v329, %v327
    %v396 = vpack.c.b16 %v330, %v328
    %v397 = vpack.c.b16 %v333, %v331
    %v398 = vpack.c.b16 %v334, %v332
    %463 = vmatprep.subr.bf16.mxu0 %v336
    %464 = vmatpush1.bf16.msra.mxu0 %v335
    %465 = vmatprep.subr.bf16.mxu0 %v338
    %466 = vmatpush1.bf16.msra.mxu0 %v337
    %467 = vmatprep.subr.bf16.mxu0 %v340
    %468 = vmatpush1.bf16.msra.mxu0 %v339
    %469 = vmatprep.subr.bf16.mxu0 %v342
    %470 = vmatpush1.bf16.msra.mxu0 %v341
    %471 = vmatprep.subr.bf16.mxu0 %v344
    %472 = vmatpush1.bf16.msra.mxu0 %v343
    %473 = vmatprep.subr.bf16.mxu0 %v346
    %474 = vmatpush1.bf16.msra.mxu0 %v345
    %475 = vmatprep.subr.bf16.mxu0 %v348
    %476 = vmatpush1.bf16.msra.mxu0 %v347
    %477 = vmatprep.subr.bf16.mxu0 %v350
    %478 = vmatpush1.bf16.msra.mxu0 %v349
    %479 = vmatprep.subr.bf16.mxu0 %v352
    %480 = vmatpush1.bf16.msra.mxu0 %v351
    %481 = vmatprep.subr.bf16.mxu0 %v354
    %482 = vmatpush1.bf16.msra.mxu0 %v353
    %483 = vmatprep.subr.bf16.mxu0 %v356
    %484 = vmatpush1.bf16.msra.mxu0 %v355
    %485 = vmatprep.subr.bf16.mxu0 %v358
    %486 = vmatpush1.bf16.msra.mxu0 %v357
    %487 = vmatprep.subr.bf16.mxu0 %v360
    %488 = vmatpush1.bf16.msra.mxu0 %v359
    %489 = vmatprep.subr.bf16.mxu0 %v362
    %490 = vmatpush1.bf16.msra.mxu0 %v361
    %491 = vmatprep.subr.bf16.mxu0 %v364
    %492 = vmatpush1.bf16.msra.mxu0 %v363
    %493 = vmatprep.subr.bf16.mxu0 %v366
    %494 = vmatpush1.bf16.msra.mxu0 %v365
    %495 = vmatprep.mubr.bf16.mxu0 %v136
    %496 = vmatmul.mubr.bf16.gmra.mrb[0].mxu0 %v135
    %v497 = vpop.f32.mrb[0].mxu0
    %v498 = vadd.f32 %v116, %v497
    %v499 = vpop.f32.mrb[0].mxu0
    %v500 = vadd.f32 %v120, %v499
    %v501 = vpop.f32.mrb[0].mxu0
    %v502 = vadd.f32 %v116, %v501
    %v503 = vpop.f32.mrb[0].mxu0
    %v504 = vadd.f32 %v120, %v503
    %505 = vdwg.mxu0
    %506 = vmatprep.subr.bf16.mxu0 %v368
    %507 = vmatpush1.bf16.msra.mxu0 %v367
    %508 = vmatprep.subr.bf16.mxu0 %v370
    %509 = vmatpush1.bf16.msra.mxu0 %v369
    %510 = vmatprep.subr.bf16.mxu0 %v372
    %511 = vmatpush1.bf16.msra.mxu0 %v371
    %512 = vmatprep.subr.bf16.mxu0 %v374
    %513 = vmatpush1.bf16.msra.mxu0 %v373
    %514 = vmatprep.subr.bf16.mxu0 %v376
    %515 = vmatpush1.bf16.msra.mxu0 %v375
    %516 = vmatprep.subr.bf16.mxu0 %v378
    %517 = vmatpush1.bf16.msra.mxu0 %v377
    %518 = vmatprep.subr.bf16.mxu0 %v380
    %519 = vmatpush1.bf16.msra.mxu0 %v379
    %520 = vmatprep.subr.bf16.mxu0 %v382
    %521 = vmatpush1.bf16.msra.mxu0 %v381
    %522 = vmatprep.subr.bf16.mxu0 %v384
    %523 = vmatpush1.bf16.msra.mxu0 %v383
    %524 = vmatprep.subr.bf16.mxu0 %v386
    %525 = vmatpush1.bf16.msra.mxu0 %v385
    %526 = vmatprep.subr.bf16.mxu0 %v388
    %527 = vmatpush1.bf16.msra.mxu0 %v387
    %528 = vmatprep.subr.bf16.mxu0 %v390
    %529 = vmatpush1.bf16.msra.mxu0 %v389
    %530 = vmatprep.subr.bf16.mxu0 %v392
    %531 = vmatpush1.bf16.msra.mxu0 %v391
    %532 = vmatprep.subr.bf16.mxu0 %v394
    %533 = vmatpush1.bf16.msra.mxu0 %v393
    %534 = vmatprep.subr.bf16.mxu0 %v396
    %535 = vmatpush1.bf16.msra.mxu0 %v395
    %536 = vmatprep.subr.bf16.mxu0 %v398
    %537 = vmatpush1.bf16.msra.mxu0 %v397
    %538 = vmatprep.mubr.bf16.mxu0 %v138
    %539 = vmatmul.mubr.bf16.gmra.mrb[0].mxu0 %v137
    %v540 = vpop.f32.mrb[0].mxu0
    %v541 = vadd.f32 %v498, %v540
    %v542 = vpop.f32.mrb[0].mxu0
    %v543 = vadd.f32 %v500, %v542
    %v544 = vpop.f32.mrb[0].mxu0
    %v545 = vadd.f32 %v502, %v544
    %v546 = vpop.f32.mrb[0].mxu0
    %v547 = vadd.f32 %v504, %v546
    %548 = vdwg.mxu0
    %549 = vst [vmem:[#allocation7] sm:$0xff] %v541
    %550 = vst [vmem:[#allocation7 + $0x8] sm:$0xff] %v543
    %551 = vst [vmem:[#allocation7 + $0x10] sm:$0xff] %v545
    %552 = vst [vmem:[#allocation7 + $0x18] sm:$0xff] %v547
    // Predicated region
    $region22: #{tpu_custom_call.1} parent=1 // pred_check
      _
    $region23: #{tpu_custom_call.1} parent=1 // pred_check_branch
      %554 = sbr.rel (0) target = $region25
    $region24: #{tpu_custom_call.1} parent=1 // pred_region
      %s556 = ssub.s32 512, 512
      %557 = vsyncadd [#allocation4], %s556
      %s558 = sshll.u32 [#allocation7], 4
      %s559 = int_to_ptr.vmem [resolvable:$true] %s558
      %564 = dma.vmem_to_hbm [thread:$0]  %s559, 512, %s3, [#allocation4], 256, 256, 16
    $region25: #{tpu_custom_call.1} parent=1 // pred_fallthru
      _
    // Predicated region
    $region26: #{tpu_custom_call.1} parent=1 // pred_check
      _
    $region27: #{tpu_custom_call.1} parent=1 // pred_check_branch
      %566 = sbr.rel (0) target = $region29
    $region28: #{tpu_custom_call.1} parent=1 // pred_region
      %567 = dma.done [#allocation4], 512
    $region29: #{tpu_custom_call.1} parent=1 // pred_fallthru
      _
    %568 = vsyncpa [#allocation3], 1
    %569 = vsyncpa [#allocation6], 1
    %570 = vsyncpa [#allocation4], 1

</llo_original>
